<compile_context>
chip_gen: v6e
topology: v6e:2x2x1
jax: 0.10.0
libtpu: 0.0.40
codegen_flags: <defaults>
</compile_context>

<pallas_src>
import functools

import jax
import jax.numpy as jnp
from jax.experimental import pallas as pl
from jax.experimental.pallas import tpu as pltpu

LANE = 128     # vreg lane width: hidden/output feature dims padded to this
SUBLANE = 8    # f32 sublane count


def _round_up(x, m):
    return (x + m - 1) // m * m


def _pad2(a, rows, cols):
    return jnp.pad(a, ((0, rows - a.shape[0]), (0, cols - a.shape[1])))


def _device_kind():
    return jax.devices()[0].device_kind.lower()


def _default_tm(batch):
    """Generation-aware batch tile (rows per grid step)."""
    batch_r = _round_up(max(batch, 1), SUBLANE)
    if batch_r <= 128:
        # Small-batch / get_action-style path: one small tile, no 128-row zero fill.
        return batch_r
    kind = _device_kind()
    if "v7" in kind:
        # 2 TensorCores: keep tile count >= 2 so both cores get work.
        return 128 if batch_r <= 4096 else 256
    if "v6" in kind:
        # 256-wide MXU M: one 256-row step fills it and amortizes step overhead.
        return 256
    # v5e / fallback: MXU M=128; larger tm only amortizes per-step overhead.
    return 256 if batch_r >= 512 else 128


def _vmem_cap_bytes():
    """Generation-aware scoped-VMEM cap (v7x has 64 MiB/TC; others 128 MiB)."""
    return (32 << 20) if "v7" in _device_kind() else (64 << 20)


def prepare_params(params):
    """One-time parameter prep (hoisted out of the per-forward path).

    Pads hidden/output feature dims to 128 lanes (zero padding keeps padded
    lanes inert: zero weight rows/cols, zero bias, tanh(0)=0) and casts weights
    to bf16 for the MXU. Biases stay f32 (added to the f32 accumulator).
    The input feature dim (w1 rows) is left unpadded.
    Returns (padded_param_dict, (in_dim, hid, out_dim)).
    """
    w1, b1 = params["w1"], params["b1"]
    w2, b2 = params["w2"], params["b2"]
    w3, b3 = params["w3"], params["b3"]
    in_dim, hid = w1.shape
    out_dim = w3.shape[1]
    hid_p = _round_up(hid, LANE)
    out_p = _round_up(out_dim, LANE)
    padded = {
        "w1": _pad2(w1, in_dim, hid_p).astype(jnp.bfloat16),
        "b1": _pad2(b1, 1, hid_p).astype(jnp.float32),
        "w2": _pad2(w2, hid_p, hid_p).astype(jnp.bfloat16),
        "b2": _pad2(b2, 1, hid_p).astype(jnp.float32),
        "w3": _pad2(w3, hid_p, out_p).astype(jnp.bfloat16),
        "b3": _pad2(b3, 1, out_p).astype(jnp.float32),
    }
    return padded, (in_dim, hid, out_dim)


def mlp_policy_kernel(x_ref, w1_ref, b1_ref, w2_ref, b2_ref, w3_ref, b3_ref, out_ref):
    """One batch tile of the fused 2-hidden-layer tanh MLP (output act = identity).

    bf16 MXU inputs, f32 accumulation; bias-add and tanh in f32 (v5e-safe).
    """
    x = x_ref[...].astype(jnp.bfloat16)                       # obs.to(f32) -> bf16 MXU input
    h = jnp.tanh(jnp.dot(x, w1_ref[...], preferred_element_type=jnp.float32) + b1_ref[...])
    h = jnp.tanh(jnp.dot(h.astype(jnp.bfloat16), w2_ref[...],
                         preferred_element_type=jnp.float32) + b2_ref[...])
    out_ref[...] = jnp.dot(h.astype(jnp.bfloat16), w3_ref[...],
                           preferred_element_type=jnp.float32) + b3_ref[...]


@functools.partial(jax.jit, static_argnames=("out_dim", "hid", "tm", "vmem_cap"))
def _mlp_forward_impl(obs, w1, b1, w2, b2, w3, b3, *, out_dim, hid, tm, vmem_cap):
    batch, in_dim = obs.shape
    hid_p = w1.shape[1]
    out_p = w3.shape[1]

    batch_p = _round_up(max(batch, tm), tm)
    n_tiles = batch_p // tm

    # Row-pad obs in its native dtype only if needed (kernel upcasts).
    obs_p = obs if batch_p == batch else jnp.pad(obs, ((0, batch_p - batch), (0, 0)))

    # VMEM budget: resident weights/biases (pipeline still allocates 2 bufs),
    # double-buffered obs/out tiles, activation headroom. Floor 16 MiB,
    # generation-aware cap.
    need = (2 * (w1.size + w2.size + w3.size)                 # bf16 weights
            + 4 * (b1.size + b2.size + b3.size)               # f32 biases
            + 2 * obs.dtype.itemsize * tm * in_dim            # obs tile, double-buffered
            + 2 * 4 * tm * out_p                              # out tile, double-buffered
            + 4 * 4 * tm * hid_p)                             # intermediates headroom
    vmem_bytes = min(max(2 * need, 16 << 20), vmem_cap)

    # CostEstimate with the real (unpadded) dims.
    flops = 2 * batch * (in_dim * hid + hid * hid + hid * out_dim)
    transcendentals = 2 * batch * hid
    bytes_accessed = (obs.dtype.itemsize * batch * in_dim
                      + 2 * (in_dim * hid + hid * hid + hid * out_dim)   # bf16 weights
                      + 4 * (2 * hid + out_dim)                          # f32 biases
                      + 4 * batch * out_dim)                             # f32 output

    grid_spec = pltpu.PrefetchScalarGridSpec(
        num_scalar_prefetch=0,
        grid=(n_tiles,),
        in_specs=[
            pl.BlockSpec((tm, in_dim), lambda i: (i, 0)),     # obs: tiled over batch
            pl.BlockSpec((in_dim, hid_p), lambda i: (0, 0)),  # weights/biases stay
            pl.BlockSpec((1, hid_p), lambda i: (0, 0)),       # VMEM-resident across
            pl.BlockSpec((hid_p, hid_p), lambda i: (0, 0)),   # the batch loop
            pl.BlockSpec((1, hid_p), lambda i: (0, 0)),
            pl.BlockSpec((hid_p, out_p), lambda i: (0, 0)),
            pl.BlockSpec((1, out_p), lambda i: (0, 0)),
        ],
        out_specs=pl.BlockSpec((tm, out_p), lambda i: (i, 0)),  # lane-dense 128-wide stores
    )

    y_pad = pl.pallas_call(
        mlp_policy_kernel,
        out_shape=jax.ShapeDtypeStruct((batch_p, out_p), jnp.float32),
        grid_spec=grid_spec,
        compiler_params=pltpu.CompilerParams(
            dimension_semantics=("parallel",),   # batch tiles split across TCs (v7x)
            vmem_limit_bytes=vmem_bytes,
        ),
        cost_estimate=pl.CostEstimate(
            flops=flops,
            transcendentals=transcendentals,
            bytes_accessed=bytes_accessed,
        ),
    )(obs_p, w1, b1, w2, b2, w3, b3)

    return y_pad[:batch, :out_dim]


def mlp_policy_forward(obs, prepared, dims, *, tm=None):
    """obs: [batch, input_size]; prepared/dims from prepare_params(params)."""
    _, hid, out_dim = dims
    if tm is None:
        tm = _default_tm(obs.shape[0])
    return _mlp_forward_impl(
        obs, prepared["w1"], prepared["b1"], prepared["w2"], prepared["b2"],
        prepared["w3"], prepared["b3"],
        out_dim=out_dim, hid=hid, tm=tm, vmem_cap=_vmem_cap_bytes())


def init_params(key, input_size, output_size, n_layers, size):
    """Deterministic Linear-style init (uniform +/- 1/sqrt(fan_in)), unpadded f32."""
    assert n_layers == 2, "script instantiates exactly 2 hidden layers"
    keys = jax.random.split(key, 6)

    def linear(kw, kb, fan_in, fan_out):
        bound = 1.0 / jnp.sqrt(jnp.float32(fan_in))
        w = jax.random.uniform(kw, (fan_in, fan_out), jnp.float32, -bound, bound)
        b = jax.random.uniform(kb, (1, fan_out), jnp.float32, -bound, bound)
        return w, b

    w1, b1 = linear(keys[0], keys[1], input_size, size)
    w2, b2 = linear(keys[2], keys[3], size, size)
    w3, b3 = linear(keys[4], keys[5], size, output_size)
    return {"w1": w1, "b1": b1, "w2": w2, "b2": b2, "w3": w3, "b3": b3}


def mlp_policy_ref(obs, params):
    """Pure-JAX reference matching the kernel math (bf16 dot inputs, f32 accumulate)."""
    f32, bf16 = jnp.float32, jnp.bfloat16
    x = obs.astype(f32).astype(bf16)
    h = jnp.tanh(jnp.dot(x, params["w1"].astype(bf16), preferred_element_type=f32)
                 + params["b1"])
    h = jnp.tanh(jnp.dot(h.astype(bf16), params["w2"].astype(bf16), preferred_element_type=f32)
                 + params["b2"])
    return (jnp.dot(h.astype(bf16), params["w3"].astype(bf16), preferred_element_type=f32)
            + params["b3"])


if __name__ == "__main__":
    # MLPPolicy(input_size=16, output_size=8, n_layers=2, size=32,
    #           activation=nn.Tanh(), output_activation=nn.Identity())
    input_size, output_size, n_layers, size = 16, 8, 2, 32

    key = jax.random.PRNGKey(0)
    k_obs, k_params = jax.random.split(key)
    params = init_params(k_params, input_size, output_size, n_layers, size)
    prepared, dims = prepare_params(params)   # one-time pad + bf16 cast (hoisted)

    # Primary case: a vectorized-env-sized batch exercising the tiled grid;
    # secondary case: tiny batch=2 exercising the small-batch (8-row tile) path.
    for batch in (256, 2):
        obs = jax.random.normal(jax.random.fold_in(k_obs, batch),
                                (batch, input_size), dtype=jnp.float32)
        out = jax.block_until_ready(mlp_policy_forward(obs, prepared, dims))
        ref = mlp_policy_ref(obs, params)
        assert out.shape == (batch, output_size)
        # bf16 MXU inputs => loosened tolerance vs. the old pure-f32 check.
        assert jnp.allclose(out, ref, atol=1e-2, rtol=1e-2), \
            f"mismatch vs JAX reference at batch={batch}"

    print("KERNEL_OK")
</pallas_src>

<mosaic_0001>
module attributes {stable_mosaic.version = 11 : i64} {
  func.func @mlp_policy_kernel(%arg0: i32, %arg1: memref<128x16xf32, #tpu.memory_space<vmem>>, %arg2: memref<16x128xbf16, #tpu.memory_space<vmem>>, %arg3: memref<1x128xf32, #tpu.memory_space<vmem>>, %arg4: memref<128x128xbf16, #tpu.memory_space<vmem>>, %arg5: memref<1x128xf32, #tpu.memory_space<vmem>>, %arg6: memref<128x128xbf16, #tpu.memory_space<vmem>>, %arg7: memref<1x128xf32, #tpu.memory_space<vmem>>, %arg8: memref<128x128xf32, #tpu.memory_space<vmem>>) attributes {dimension_semantics = [#tpu.dimension_semantics<parallel>], iteration_bounds = array<i64: 2>, scalar_prefetch = 0 : i64, scratch_operands = 0 : i64, tpu.core_type = #tpu.core_type<tc>, window_params = [{transform_indices = @transform_0, window_bounds = array<i64: 128, 16>}, {pipeline_mode = #tpu.pipeline_mode<synchronous>, transform_indices = @transform_1, window_bounds = array<i64: 16, 128>}, {pipeline_mode = #tpu.pipeline_mode<synchronous>, transform_indices = @transform_2, window_bounds = array<i64: 1, 128>}, {pipeline_mode = #tpu.pipeline_mode<synchronous>, transform_indices = @transform_3, window_bounds = array<i64: 128, 128>}, {pipeline_mode = #tpu.pipeline_mode<synchronous>, transform_indices = @transform_4, window_bounds = array<i64: 1, 128>}, {pipeline_mode = #tpu.pipeline_mode<synchronous>, transform_indices = @transform_5, window_bounds = array<i64: 128, 128>}, {pipeline_mode = #tpu.pipeline_mode<synchronous>, transform_indices = @transform_6, window_bounds = array<i64: 1, 128>}, {transform_indices = @transform_7, window_bounds = array<i64: 128, 128>}]} {
    %c0 = arith.constant 0 : index
    %c0_0 = arith.constant 0 : index
    %0 = vector.load %arg1[%c0, %c0_0] : memref<128x16xf32, #tpu.memory_space<vmem>>, vector<128x16xf32>
    %1 = arith.truncf %0 : vector<128x16xf32> to vector<128x16xbf16>
    %c0_1 = arith.constant 0 : index
    %c0_2 = arith.constant 0 : index
    %2 = vector.load %arg2[%c0_1, %c0_2] : memref<16x128xbf16, #tpu.memory_space<vmem>>, vector<16x128xbf16>
    %cst = arith.constant dense<0.000000e+00> : vector<128x128xf32>
    %3 = tpu.matmul %1, %2, %cst {dimension_numbers = #tpu.dot_dimension_numbers<[1], [0], [0], [1], [0, 0, 1, 1], [], []>} : vector<128x16xbf16>, vector<16x128xbf16>, vector<128x128xf32> -> vector<128x128xf32>
    %c0_3 = arith.constant 0 : index
    %c0_4 = arith.constant 0 : index
    %4 = vector.load %arg3[%c0_3, %c0_4] : memref<1x128xf32, #tpu.memory_space<vmem>>, vector<1x128xf32>
    %5 = vector.broadcast %4 : vector<1x128xf32> to vector<128x128xf32>
    %6 = arith.addf %3, %5 : vector<128x128xf32>
    %7 = math.tanh %6 : vector<128x128xf32>
    %8 = arith.truncf %7 : vector<128x128xf32> to vector<128x128xbf16>
    %c0_5 = arith.constant 0 : index
    %c0_6 = arith.constant 0 : index
    %9 = vector.load %arg4[%c0_5, %c0_6] : memref<128x128xbf16, #tpu.memory_space<vmem>>, vector<128x128xbf16>
    %cst_7 = arith.constant dense<0.000000e+00> : vector<128x128xf32>
    %10 = tpu.matmul %8, %9, %cst_7 {dimension_numbers = #tpu.dot_dimension_numbers<[1], [0], [0], [1], [0, 0, 1, 1], [], []>} : vector<128x128xbf16>, vector<128x128xbf16>, vector<128x128xf32> -> vector<128x128xf32>
    %c0_8 = arith.constant 0 : index
    %c0_9 = arith.constant 0 : index
    %11 = vector.load %arg5[%c0_8, %c0_9] : memref<1x128xf32, #tpu.memory_space<vmem>>, vector<1x128xf32>
    %12 = vector.broadcast %11 : vector<1x128xf32> to vector<128x128xf32>
    %13 = arith.addf %10, %12 : vector<128x128xf32>
    %14 = math.tanh %13 : vector<128x128xf32>
    %15 = arith.truncf %14 : vector<128x128xf32> to vector<128x128xbf16>
    %c0_10 = arith.constant 0 : index
    %c0_11 = arith.constant 0 : index
    %16 = vector.load %arg6[%c0_10, %c0_11] : memref<128x128xbf16, #tpu.memory_space<vmem>>, vector<128x128xbf16>
    %cst_12 = arith.constant dense<0.000000e+00> : vector<128x128xf32>
    %17 = tpu.matmul %15, %16, %cst_12 {dimension_numbers = #tpu.dot_dimension_numbers<[1], [0], [0], [1], [0, 0, 1, 1], [], []>} : vector<128x128xbf16>, vector<128x128xbf16>, vector<128x128xf32> -> vector<128x128xf32>
    %c0_13 = arith.constant 0 : index
    %c0_14 = arith.constant 0 : index
    %18 = vector.load %arg7[%c0_13, %c0_14] : memref<1x128xf32, #tpu.memory_space<vmem>>, vector<1x128xf32>
    %19 = vector.broadcast %18 : vector<1x128xf32> to vector<128x128xf32>
    %20 = arith.addf %17, %19 : vector<128x128xf32>
    %c0_15 = arith.constant 0 : index
    %c0_16 = arith.constant 0 : index
    %21 = vector.load %arg8[%c0_15, %c0_16] : memref<128x128xf32, #tpu.memory_space<vmem>>, vector<128x128xf32>
    tpu.vector_store %arg8[%c0_15, %c0_16], %20 {strides = array<i32>} : memref<128x128xf32, #tpu.memory_space<vmem>>, vector<128x128xf32>,
    return
  }
  func.func @transform_0(%arg0: i32) -> (i32, i32) {
    %c0_i32 = arith.constant 0 : i32
    %c0_i32_0 = arith.constant 0 : i32
    return %arg0, %c0_i32 : i32, i32
  }
  func.func @transform_1(%arg0: i32) -> (i32, i32) {
    %c0_i32 = arith.constant 0 : i32
    %c0_i32_0 = arith.constant 0 : i32
    %c0_i32_1 = arith.constant 0 : i32
    return %c0_i32, %c0_i32_0 : i32, i32
  }
  func.func @transform_2(%arg0: i32) -> (i32, i32) {
    %c0_i32 = arith.constant 0 : i32
    %c0_i32_0 = arith.constant 0 : i32
    %c0_i32_1 = arith.constant 0 : i32
    return %c0_i32, %c0_i32_0 : i32, i32
  }
  func.func @transform_3(%arg0: i32) -> (i32, i32) {
    %c0_i32 = arith.constant 0 : i32
    %c0_i32_0 = arith.constant 0 : i32
    %c0_i32_1 = arith.constant 0 : i32
    return %c0_i32, %c0_i32_0 : i32, i32
  }
  func.func @transform_4(%arg0: i32) -> (i32, i32) {
    %c0_i32 = arith.constant 0 : i32
    %c0_i32_0 = arith.constant 0 : i32
    %c0_i32_1 = arith.constant 0 : i32
    return %c0_i32, %c0_i32_0 : i32, i32
  }
  func.func @transform_5(%arg0: i32) -> (i32, i32) {
    %c0_i32 = arith.constant 0 : i32
    %c0_i32_0 = arith.constant 0 : i32
    %c0_i32_1 = arith.constant 0 : i32
    return %c0_i32, %c0_i32_0 : i32, i32
  }
  func.func @transform_6(%arg0: i32) -> (i32, i32) {
    %c0_i32 = arith.constant 0 : i32
    %c0_i32_0 = arith.constant 0 : i32
    %c0_i32_1 = arith.constant 0 : i32
    return %c0_i32, %c0_i32_0 : i32, i32
  }
  func.func @transform_7(%arg0: i32) -> (i32, i32) {
    %c0_i32 = arith.constant 0 : i32
    %c0_i32_0 = arith.constant 0 : i32
    return %arg0, %c0_i32 : i32, i32
  }
}

</mosaic_0001>

<llo_original>
// kernel: _mlp_forward_impl.1
$region0: #{_mlp_forward_impl.1}
  #allocation0 [shape = 'u32[]', space=smem, size = 0x4, offset = 0x4, fixed_abs, tag = 'smem constant byte address 0x4 - core index']
  #allocation1 [shape = 'u32[144,128]{1,0:T(1,128)}', space=vmem, size = 0x12000, scoped, tag = 'internal scratch']
  %s0 = inlined_call_operand.vmem [shape: f32[256,16], index: 0, kind: input, shape index: {}]
  %s1 = inlined_call_operand.vmem [shape: bf16[16,128], index: 1, kind: input, shape index: {}]
  %s2 = inlined_call_operand.vmem [shape: f32[1,128], index: 2, kind: input, shape index: {}]
  %s3 = inlined_call_operand.vmem [shape: bf16[128,128], index: 3, kind: input, shape index: {}]
  %s4 = inlined_call_operand.vmem [shape: f32[1,128], index: 4, kind: input, shape index: {}]
  %s5 = inlined_call_operand.vmem [shape: bf16[128,128], index: 5, kind: input, shape index: {}]
  %s6 = inlined_call_operand.vmem [shape: f32[1,128], index: 6, kind: input, shape index: {}]
  %s7 = inlined_call_operand.vmem [shape: f32[256,128], index: 7, kind: output, shape index: {}]
  %s8 = sld [smem:[#allocation0]]
  $region61: #{_mlp_forward_impl.1} parent=0
    _
  %s10 = ssub.s32 1, %s8
  %s11 = scalar_select 0, %s10, %s8
  loop: start=0, step=1, limit=4
  $region2: #{_mlp_forward_impl.1} parent=0 // loop_pre_header
    _
  $region3: #{_mlp_forward_impl.1} parent=0 // loop_header
    %s13 = sphi 0, %s17
    %p14 = scmp.ge.s32.totalorder %s13, 4
    %s23 = sphi 0, %s25
    %s26 = sphi 0, %s23
    %s27 = sphi 0, %s26
    %s43 = sphi 0, %s27
    %s47 = sphi 0, %s47
    %s49 = sphi 0, %s47
    %s50 = sphi 0, %s49
    %s64 = sphi 0, %s50
    %s68 = sphi 0, %s68
    %s70 = sphi 0, %s68
    %s71 = sphi 0, %s70
    %s85 = sphi 0, %s71
    %s89 = sphi 0, %s89
    %s91 = sphi 0, %s89
    %s92 = sphi 0, %s91
    %s106 = sphi 0, %s92
    %s110 = sphi 0, %s110
    %s112 = sphi 0, %s110
    %s113 = sphi 0, %s112
    %s127 = sphi 0, %s113
    %s131 = sphi 0, %s131
    %s133 = sphi 0, %s131
    %s134 = sphi 0, %s133
    %s148 = sphi 0, %s134
    %s152 = sphi 0, %s152
    %s154 = sphi 0, %s152
    %s155 = sphi 0, %s154
    %s169 = sphi 0, %s155
    %s175 = sphi 0, %s177
    %s178 = sphi 0, %s175
    %s179 = sphi 0, %s178
    %s195 = sphi 0, %s179
  $region4: #{_mlp_forward_impl.1} parent=0 // loop_header_branch
    %16 = sbr.rel (%p14) target = $region8
  $region5: #{_mlp_forward_impl.1} parent=0 // loop_body
    %s18 = ssub.s32 %s13, 1
    %s19 = ssub.s32 %s13, 2
    %s20 = sadd.s32 %s13, 1
    %s21 = ssub.s32 %s13, %s20
    %p22 = scmp.eq.s32.totalorder %s21, 0
    %s24 = sadd.s32 %s23, 1
    %s25 = scalar_select %p22, %s23, %s24
    %p28 = pneg %p22
    %p29 = scmp.eq.s32.totalorder %s13, 1
    %p30 = por %p28, %p29
    %p31 = scmp.ne.s32.totalorder %s23, %s26
    %p32 = scmp.eq.s32.totalorder %s13, 0
    %p33 = por %p31, %p32
    %p34 = scmp.ne.s32.totalorder %s23, %s26
    %p35 = scmp.eq.s32.totalorder %s18, 1
    %p36 = por %p34, %p35
    %p37 = scmp.ne.s32.totalorder %s26, %s27
    %p38 = scmp.eq.s32.totalorder %s18, 0
    %p39 = por %p37, %p38
    %p40 = scmp.ne.s32.totalorder %s26, %s27
    %p41 = scmp.eq.s32.totalorder %s19, 1
    %p42 = por %p40, %p41
    %p44 = scmp.ne.s32.totalorder %s27, %s43
    %p45 = scmp.eq.s32.totalorder %s19, 0
    %p46 = por %p44, %p45
    %s48 = sadd.s32 %s47, 1
    %p51 = scmp.eq.s32.totalorder %s13, 1
    %p52 = scmp.ne.s32.totalorder %s47, %s49
    %p53 = scmp.eq.s32.totalorder %s13, 0
    %p54 = por %p52, %p53
    %p55 = scmp.ne.s32.totalorder %s47, %s49
    %p56 = scmp.eq.s32.totalorder %s18, 1
    %p57 = por %p55, %p56
    %p58 = scmp.ne.s32.totalorder %s49, %s50
    %p59 = scmp.eq.s32.totalorder %s18, 0
    %p60 = por %p58, %p59
    %p61 = scmp.ne.s32.totalorder %s49, %s50
    %p62 = scmp.eq.s32.totalorder %s19, 1
    %p63 = por %p61, %p62
    %p65 = scmp.ne.s32.totalorder %s50, %s64
    %p66 = scmp.eq.s32.totalorder %s19, 0
    %p67 = por %p65, %p66
    %s69 = sadd.s32 %s68, 1
    %p72 = scmp.eq.s32.totalorder %s13, 1
    %p73 = scmp.ne.s32.totalorder %s68, %s70
    %p74 = scmp.eq.s32.totalorder %s13, 0
    %p75 = por %p73, %p74
    %p76 = scmp.ne.s32.totalorder %s68, %s70
    %p77 = scmp.eq.s32.totalorder %s18, 1
    %p78 = por %p76, %p77
    %p79 = scmp.ne.s32.totalorder %s70, %s71
    %p80 = scmp.eq.s32.totalorder %s18, 0
    %p81 = por %p79, %p80
    %p82 = scmp.ne.s32.totalorder %s70, %s71
    %p83 = scmp.eq.s32.totalorder %s19, 1
    %p84 = por %p82, %p83
    %p86 = scmp.ne.s32.totalorder %s71, %s85
    %p87 = scmp.eq.s32.totalorder %s19, 0
    %p88 = por %p86, %p87
    %s90 = sadd.s32 %s89, 1
    %p93 = scmp.eq.s32.totalorder %s13, 1
    %p94 = scmp.ne.s32.totalorder %s89, %s91
    %p95 = scmp.eq.s32.totalorder %s13, 0
    %p96 = por %p94, %p95
    %p97 = scmp.ne.s32.totalorder %s89, %s91
    %p98 = scmp.eq.s32.totalorder %s18, 1
    %p99 = por %p97, %p98
    %p100 = scmp.ne.s32.totalorder %s91, %s92
    %p101 = scmp.eq.s32.totalorder %s18, 0
    %p102 = por %p100, %p101
    %p103 = scmp.ne.s32.totalorder %s91, %s92
    %p104 = scmp.eq.s32.totalorder %s19, 1
    %p105 = por %p103, %p104
    %p107 = scmp.ne.s32.totalorder %s92, %s106
    %p108 = scmp.eq.s32.totalorder %s19, 0
    %p109 = por %p107, %p108
    %s111 = sadd.s32 %s110, 1
    %p114 = scmp.eq.s32.totalorder %s13, 1
    %p115 = scmp.ne.s32.totalorder %s110, %s112
    %p116 = scmp.eq.s32.totalorder %s13, 0
    %p117 = por %p115, %p116
    %p118 = scmp.ne.s32.totalorder %s110, %s112
    %p119 = scmp.eq.s32.totalorder %s18, 1
    %p120 = por %p118, %p119
    %p121 = scmp.ne.s32.totalorder %s112, %s113
    %p122 = scmp.eq.s32.totalorder %s18, 0
    %p123 = por %p121, %p122
    %p124 = scmp.ne.s32.totalorder %s112, %s113
    %p125 = scmp.eq.s32.totalorder %s19, 1
    %p126 = por %p124, %p125
    %p128 = scmp.ne.s32.totalorder %s113, %s127
    %p129 = scmp.eq.s32.totalorder %s19, 0
    %p130 = por %p128, %p129
    %s132 = sadd.s32 %s131, 1
    %p135 = scmp.eq.s32.totalorder %s13, 1
    %p136 = scmp.ne.s32.totalorder %s131, %s133
    %p137 = scmp.eq.s32.totalorder %s13, 0
    %p138 = por %p136, %p137
    %p139 = scmp.ne.s32.totalorder %s131, %s133
    %p140 = scmp.eq.s32.totalorder %s18, 1
    %p141 = por %p139, %p140
    %p142 = scmp.ne.s32.totalorder %s133, %s134
    %p143 = scmp.eq.s32.totalorder %s18, 0
    %p144 = por %p142, %p143
    %p145 = scmp.ne.s32.totalorder %s133, %s134
    %p146 = scmp.eq.s32.totalorder %s19, 1
    %p147 = por %p145, %p146
    %p149 = scmp.ne.s32.totalorder %s134, %s148
    %p150 = scmp.eq.s32.totalorder %s19, 0
    %p151 = por %p149, %p150
    %s153 = sadd.s32 %s152, 1
    %p156 = scmp.eq.s32.totalorder %s13, 1
    %p157 = scmp.ne.s32.totalorder %s152, %s154
    %p158 = scmp.eq.s32.totalorder %s13, 0
    %p159 = por %p157, %p158
    %p160 = scmp.ne.s32.totalorder %s152, %s154
    %p161 = scmp.eq.s32.totalorder %s18, 1
    %p162 = por %p160, %p161
    %p163 = scmp.ne.s32.totalorder %s154, %s155
    %p164 = scmp.eq.s32.totalorder %s18, 0
    %p165 = por %p163, %p164
    %p166 = scmp.ne.s32.totalorder %s154, %s155
    %p167 = scmp.eq.s32.totalorder %s19, 1
    %p168 = por %p166, %p167
    %p170 = scmp.ne.s32.totalorder %s155, %s169
    %p171 = scmp.eq.s32.totalorder %s19, 0
    %p172 = por %p170, %p171
    %s173 = ssub.s32 %s13, %s20
    %p174 = scmp.eq.s32.totalorder %s173, 0
    %s176 = sadd.s32 %s175, 1
    %s177 = scalar_select %p174, %s175, %s176
    %p180 = pneg %p174
    %p181 = scmp.eq.s32.totalorder %s13, 1
    %p182 = por %p180, %p181
    %p183 = scmp.ne.s32.totalorder %s175, %s178
    %p184 = scmp.eq.s32.totalorder %s13, 0
    %p185 = por %p183, %p184
    %p186 = scmp.ne.s32.totalorder %s175, %s178
    %p187 = scmp.eq.s32.totalorder %s18, 1
    %p188 = por %p186, %p187
    %p189 = scmp.ne.s32.totalorder %s178, %s179
    %p190 = scmp.eq.s32.totalorder %s18, 0
    %p191 = por %p189, %p190
    %p192 = scmp.ne.s32.totalorder %s178, %s179
    %p193 = scmp.eq.s32.totalorder %s19, 1
    %p194 = por %p192, %p193
    %p196 = scmp.ne.s32.totalorder %s179, %s195
    %p197 = scmp.eq.s32.totalorder %s19, 0
    %p198 = por %p196, %p197
    %p199 = scmp.le.s32.totalorder 1, %s13
    %p200 = scmp.lt.s32.totalorder %s13, 3
    %p201 = pnand %p199, %p200
    %p202 = pneg %p201
    // Predicated region
    $region9: #{_mlp_forward_impl.1} parent=5 // pred_check
      _
    $region10: #{_mlp_forward_impl.1} parent=5 // pred_check_branch
      %204 = sbr.rel (%p201) target = $region12
    $region11: #{_mlp_forward_impl.1} parent=5 // pred_region
      %s205 = ssub.s32 %s13, 1
      // Predicated region
      $region13: #{_mlp_forward_impl.1} parent=11 // pred_check
        %p206 = pneg %p60
      $region14: #{_mlp_forward_impl.1} parent=11 // pred_check_branch
        %208 = sbr.rel (%p206) target = $region16
      $region15: #{_mlp_forward_impl.1} parent=11 // pred_region
        _
      $region16: #{_mlp_forward_impl.1} parent=11 // pred_fallthru
        _
      // Predicated region
      $region17: #{_mlp_forward_impl.1} parent=11 // pred_check
        %p209 = pneg %p81
      $region18: #{_mlp_forward_impl.1} parent=11 // pred_check_branch
        %211 = sbr.rel (%p209) target = $region20
      $region19: #{_mlp_forward_impl.1} parent=11 // pred_region
        _
      $region20: #{_mlp_forward_impl.1} parent=11 // pred_fallthru
        _
      // Predicated region
      $region21: #{_mlp_forward_impl.1} parent=11 // pred_check
        %p212 = pneg %p102
      $region22: #{_mlp_forward_impl.1} parent=11 // pred_check_branch
        %214 = sbr.rel (%p212) target = $region24
      $region23: #{_mlp_forward_impl.1} parent=11 // pred_region
        _
      $region24: #{_mlp_forward_impl.1} parent=11 // pred_fallthru
        _
      // Predicated region
      $region25: #{_mlp_forward_impl.1} parent=11 // pred_check
        %p215 = pneg %p123
      $region26: #{_mlp_forward_impl.1} parent=11 // pred_check_branch
        %217 = sbr.rel (%p215) target = $region28
      $region27: #{_mlp_forward_impl.1} parent=11 // pred_region
        _
      $region28: #{_mlp_forward_impl.1} parent=11 // pred_fallthru
        _
      // Predicated region
      $region29: #{_mlp_forward_impl.1} parent=11 // pred_check
        %p218 = pneg %p144
      $region30: #{_mlp_forward_impl.1} parent=11 // pred_check_branch
        %220 = sbr.rel (%p218) target = $region32
      $region31: #{_mlp_forward_impl.1} parent=11 // pred_region
        _
      $region32: #{_mlp_forward_impl.1} parent=11 // pred_fallthru
        _
      // Predicated region
      $region33: #{_mlp_forward_impl.1} parent=11 // pred_check
        %p221 = pneg %p165
      $region34: #{_mlp_forward_impl.1} parent=11 // pred_check_branch
        %223 = sbr.rel (%p221) target = $region36
      $region35: #{_mlp_forward_impl.1} parent=11 // pred_region
        _
      $region36: #{_mlp_forward_impl.1} parent=11 // pred_fallthru
        _
    $region12: #{_mlp_forward_impl.1} parent=5 // pred_fallthru
      _
    %p224 = scmp.lt.s32.totalorder %s13, 2
    // Predicated region
    $region37: #{_mlp_forward_impl.1} parent=5 // pred_check
      %p225 = pneg %p224
    $region38: #{_mlp_forward_impl.1} parent=5 // pred_check_branch
      %227 = sbr.rel (%p225) target = $region40
    $region39: #{_mlp_forward_impl.1} parent=5 // pred_region
      // Predicated region
      $region41: #{_mlp_forward_impl.1} parent=39 // pred_check
        %p228 = pneg %p33
      $region42: #{_mlp_forward_impl.1} parent=39 // pred_check_branch
        %230 = sbr.rel (%p228) target = $region44
      $region43: #{_mlp_forward_impl.1} parent=39 // pred_region
        %s231 = smul.u32 16, %s13
        %p232 = scmp.lt.s32.totalorder %s231, 31
        %s233 = scalar_select %p232, %s231, 31
        %s234 = smul.addr %s233, 8
        %s235 = scalar_lea.vmem %s0, %s234
        %s236 = smul.u32 16, %s13
      $region44: #{_mlp_forward_impl.1} parent=39 // pred_fallthru
        _
    $region40: #{_mlp_forward_impl.1} parent=5 // pred_fallthru
      _
    %p237 = scmp.le.s32.totalorder 1, %s13
    %p238 = scmp.lt.s32.totalorder %s13, 3
    %p239 = pnand %p237, %p238
    %p240 = pneg %p239
    // Predicated region
    $region45: #{_mlp_forward_impl.1} parent=5 // pred_check
      _
    $region46: #{_mlp_forward_impl.1} parent=5 // pred_check_branch
      %242 = sbr.rel (%p239) target = $region48
    $region47: #{_mlp_forward_impl.1} parent=5 // pred_region
      %s243 = ssub.s32 %s13, 1
      %s244 = smul.u32 16, %s18
      %p245 = scmp.lt.s32.totalorder %s244, 31
      %s246 = scalar_select %p245, %s244, 31
      %s247 = smul.addr %s246, 8
      %s248 = scalar_lea.vmem %s0, %s247
      %p249 = pneg %p39
      %p250 = pneg %p36
      %p251 = pneg %p60
      %p252 = pneg %p57
      %p253 = pneg %p81
      %p254 = pneg %p78
      %p255 = pneg %p102
      %p256 = pneg %p99
      %p257 = pneg %p123
      %p258 = pneg %p120
      %p259 = pneg %p144
      %p260 = pneg %p141
      %p261 = pneg %p165
      %p262 = pneg %p162
      %p263 = pneg %p191
      %p264 = pneg %p188
      %s265 = smul.u32 16, %s18
      %p266 = scmp.lt.s32.totalorder %s265, 31
      %s267 = scalar_select %p266, %s265, 31
      %s268 = smul.addr %s267, 8
      %s269 = scalar_lea.vmem %s7, %s268
      %s270 = smul.u32 16, %s18
      %p271 = scmp.lt.s32.totalorder %s270, 31
      %s272 = scalar_select %p271, %s270, 31
      %s273 = smul.addr %s272, 8
      %s274 = scalar_lea.vmem %s0, %s273
      %s275 = smul.u32 16, %s18
      %s276 = smul.u32 16, %s18
      %p277 = scmp.lt.s32.totalorder %s276, 31
      %s278 = scalar_select %p277, %s276, 31
      %s279 = smul.addr %s278, 8
      %s280 = scalar_lea.vmem %s7, %s279
      %s281 = smul.u32 16, %s18
      %v283 = vld [vmem:[%s274] sm:$0xff]
      %v284 = vld [vmem:[%s274 + $0x8] sm:$0xff]
      %v285 = vld [vmem:[%s274 + $0x10] sm:$0xff]
      %v286 = vld [vmem:[%s274 + $0x18] sm:$0xff]
      %v287 = vld [vmem:[%s274 + $0x20] sm:$0xff]
      %v288 = vld [vmem:[%s274 + $0x28] sm:$0xff]
      %v289 = vld [vmem:[%s274 + $0x30] sm:$0xff]
      %v290 = vld [vmem:[%s274 + $0x38] sm:$0xff]
      %v291 = vld [vmem:[%s274 + $0x40] sm:$0xff]
      %v292 = vld [vmem:[%s274 + $0x48] sm:$0xff]
      %v293 = vld [vmem:[%s274 + $0x50] sm:$0xff]
      %v294 = vld [vmem:[%s274 + $0x58] sm:$0xff]
      %v295 = vld [vmem:[%s274 + $0x60] sm:$0xff]
      %v296 = vld [vmem:[%s274 + $0x68] sm:$0xff]
      %v297 = vld [vmem:[%s274 + $0x70] sm:$0xff]
      %v298 = vld [vmem:[%s274 + $0x78] sm:$0xff]
      %v299 = vpack.c.bf16 %v284, %v283
      %v300 = vpack.c.bf16 %v286, %v285
      %v301 = vpack.c.bf16 %v288, %v287
      %v302 = vpack.c.bf16 %v290, %v289
      %v303 = vpack.c.bf16 %v292, %v291
      %v304 = vpack.c.bf16 %v294, %v293
      %v305 = vpack.c.bf16 %v296, %v295
      %v306 = vpack.c.bf16 %v298, %v297
      %v307 = vld [vmem:[%s1] sm:$0xf]
      %v308 = vld [vmem:[%s1 + $0x4] sm:$0xf]
      %v309 = vld [vmem:[%s2] sm:$0x1]
      %v311 = vlaneseq
      %v312 = vshrl.u32 %v311, 7
      %v313 = vsub.s32 0, %v312
      %v314 = vrot.slane %v309, %v313
      %v318 = vunpack.c.l.b16 %v307
      %v319 = vunpack.c.l.b16 %v308
      %v320 = vpack.c.b16 %v319, %v318
      %vm322 = vcmask 130048
      %v324 = vsel %vm322, %v299, 0
      %v327 = vsel %vm322, %v300, 0
      %v330 = vsel %vm322, %v301, 0
      %v333 = vsel %vm322, %v302, 0
      %v336 = vsel %vm322, %v303, 0
      %v339 = vsel %vm322, %v304, 0
      %v342 = vsel %vm322, %v305, 0
      %v345 = vsel %vm322, %v306, 0
      %347 = vmatprep.subr.bf16.mxu0 0
      %348 = vmatpush1.bf16.msra.mxu0 0
      %349 = vmatprep.subr.bf16.mxu0 0
      %350 = vmatpush1.bf16.msra.mxu0 0
      %351 = vmatprep.subr.bf16.mxu0 0
      %352 = vmatpush1.bf16.msra.mxu0 0
      %353 = vmatprep.subr.bf16.mxu0 0
      %354 = vmatpush1.bf16.msra.mxu0 0
      %355 = vmatprep.subr.bf16.mxu0 0
      %356 = vmatpush1.bf16.msra.mxu0 0
      %357 = vmatprep.subr.bf16.mxu0 0
      %358 = vmatpush1.bf16.msra.mxu0 0
      %359 = vmatprep.subr.bf16.mxu0 0
      %360 = vmatpush1.bf16.msra.mxu0 0
      %361 = vmatprep.subr.bf16.mxu0 0
      %362 = vmatpush1.bf16.msra.mxu0 %v320
      %363 = vmatprep.subr.bf16.mxu0 0
      %364 = vmatpush2.bf16.msra.mxu0 0
      %365 = vmatprep.subr.bf16.mxu0 0
      %366 = vmatpush2.bf16.msra.mxu0 0
      %367 = vmatprep.subr.bf16.mxu0 0
      %368 = vmatpush2.bf16.msra.mxu0 0
      %369 = vmatprep.subr.bf16.mxu0 0
      %370 = vmatpush2.bf16.msra.mxu0 0
      %371 = vmatprep.subr.bf16.mxu0 0
      %372 = vmatpush2.bf16.msra.mxu0 0
      %373 = vmatprep.subr.bf16.mxu0 0
      %374 = vmatpush2.bf16.msra.mxu0 0
      %375 = vmatprep.subr.bf16.mxu0 0
      %376 = vmatpush2.bf16.msra.mxu0 0
      %377 = vmatprep.subr.bf16.mxu0 0
      %378 = vmatpush2.bf16.msra.mxu0 0
      %379 = vmatprep.mubr.bf16.mxu0 0
      %380 = vmatmul.mubr.bf16.gmra.mxu0 %v324
      %v381 = vpop.f32.mrf.mxu0
      %v382 = vadd.f32 %v314, %v381
      %v383 = vpop.f32.mrf.mxu0
      %v384 = vpop.f32.mrf.mxu0
      %v385 = vadd.f32 %v314, %v384
      %v386 = vpop.f32.mrf.mxu0
      %387 = vmatprep.mubr.bf16.mxu0 0
      %388 = vmatmul.mubr.bf16.gmra.mxu0 %v327
      %v389 = vpop.f32.mrf.mxu0
      %v390 = vadd.f32 %v314, %v389
      %v391 = vpop.f32.mrf.mxu0
      %v392 = vpop.f32.mrf.mxu0
      %v393 = vadd.f32 %v314, %v392
      %v394 = vpop.f32.mrf.mxu0
      %395 = vmatprep.mubr.bf16.mxu0 0
      %396 = vmatmul.mubr.bf16.gmra.mxu0 %v330
      %v397 = vpop.f32.mrf.mxu0
      %v398 = vadd.f32 %v314, %v397
      %v399 = vpop.f32.mrf.mxu0
      %v400 = vpop.f32.mrf.mxu0
      %v401 = vadd.f32 %v314, %v400
      %v402 = vpop.f32.mrf.mxu0
      %403 = vmatprep.mubr.bf16.mxu0 0
      %404 = vmatmul.mubr.bf16.gmra.mxu0 %v333
      %v405 = vpop.f32.mrf.mxu0
      %v406 = vadd.f32 %v314, %v405
      %v407 = vpop.f32.mrf.mxu0
      %v408 = vpop.f32.mrf.mxu0
      %v409 = vadd.f32 %v314, %v408
      %v410 = vpop.f32.mrf.mxu0
      %411 = vmatprep.mubr.bf16.mxu0 0
      %412 = vmatmul.mubr.bf16.gmra.mxu0 %v336
      %v413 = vpop.f32.mrf.mxu0
      %v414 = vadd.f32 %v314, %v413
      %v415 = vpop.f32.mrf.mxu0
      %v416 = vpop.f32.mrf.mxu0
      %v417 = vadd.f32 %v314, %v416
      %v418 = vpop.f32.mrf.mxu0
      %419 = vmatprep.mubr.bf16.mxu0 0
      %420 = vmatmul.mubr.bf16.gmra.mxu0 %v339
      %v421 = vpop.f32.mrf.mxu0
      %v422 = vadd.f32 %v314, %v421
      %v423 = vpop.f32.mrf.mxu0
      %v424 = vpop.f32.mrf.mxu0
      %v425 = vadd.f32 %v314, %v424
      %v426 = vpop.f32.mrf.mxu0
      %427 = vmatprep.mubr.bf16.mxu0 0
      %428 = vmatmul.mubr.bf16.gmra.mxu0 %v342
      %v429 = vpop.f32.mrf.mxu0
      %v430 = vadd.f32 %v314, %v429
      %v431 = vpop.f32.mrf.mxu0
      %v432 = vpop.f32.mrf.mxu0
      %v433 = vadd.f32 %v314, %v432
      %v434 = vpop.f32.mrf.mxu0
      %435 = vmatprep.mubr.bf16.mxu0 0
      %436 = vmatmul.mubr.bf16.gmra.mxu0 %v345
      %v437 = vpop.f32.mrf.mxu0
      %v438 = vadd.f32 %v314, %v437
      %v439 = vpop.f32.mrf.mxu0
      %v440 = vpop.f32.mrf.mxu0
      %v441 = vadd.f32 %v314, %v440
      %v442 = vpop.f32.mrf.mxu0
      %443 = vdwg.mxu0
      %v444 = vtanh.pop %v382
      %v445 = vtanh.pop %v385
      %v446 = vtanh.pop %v390
      %v447 = vtanh.pop %v393
      %v448 = vtanh.pop %v398
      %v449 = vtanh.pop %v401
      %v450 = vtanh.pop %v406
      %v451 = vtanh.pop %v409
      %v452 = vtanh.pop %v414
      %v453 = vtanh.pop %v417
      %v454 = vtanh.pop %v422
      %v455 = vtanh.pop %v425
      %v456 = vtanh.pop %v430
      %v457 = vtanh.pop %v433
      %v458 = vtanh.pop %v438
      %v459 = vtanh.pop %v441
      %v460 = vpack.c.bf16 %v445, %v444
      %v461 = vpack.c.bf16 %v447, %v446
      %v462 = vpack.c.bf16 %v449, %v448
      %v463 = vpack.c.bf16 %v451, %v450
      %v464 = vpack.c.bf16 %v453, %v452
      %v465 = vpack.c.bf16 %v455, %v454
      %v466 = vpack.c.bf16 %v457, %v456
      %v467 = vpack.c.bf16 %v459, %v458
      %v468 = vld [vmem:[%s3] sm:$0xf]
      %v469 = vld [vmem:[%s3 + $0x4] sm:$0xf]
      %v470 = vld [vmem:[%s3 + $0x8] sm:$0xf]
      %v471 = vld [vmem:[%s3 + $0xc] sm:$0xf]
      %v472 = vld [vmem:[%s3 + $0x10] sm:$0xf]
      %v473 = vld [vmem:[%s3 + $0x14] sm:$0xf]
      %v474 = vld [vmem:[%s3 + $0x18] sm:$0xf]
      %v475 = vld [vmem:[%s3 + $0x1c] sm:$0xf]
      %v476 = vld [vmem:[%s3 + $0x20] sm:$0xf]
      %v477 = vld [vmem:[%s3 + $0x24] sm:$0xf]
      %v478 = vld [vmem:[%s3 + $0x28] sm:$0xf]
      %v479 = vld [vmem:[%s3 + $0x2c] sm:$0xf]
      %v480 = vld [vmem:[%s3 + $0x30] sm:$0xf]
      %v481 = vld [vmem:[%s3 + $0x34] sm:$0xf]
      %v482 = vld [vmem:[%s3 + $0x38] sm:$0xf]
      %v483 = vld [vmem:[%s3 + $0x3c] sm:$0xf]
      %v484 = vld [vmem:[%s4] sm:$0x1]
      %v486 = vlaneseq
      %v487 = vshrl.u32 %v486, 7
      %v488 = vsub.s32 0, %v487
      %v489 = vrot.slane %v484, %v488
      %v507 = vunpack.c.l.b16 %v468
      %v508 = vunpack.c.l.b16 %v469
      %v509 = vunpack.c.l.b16 %v470
      %v510 = vunpack.c.l.b16 %v471
      %v511 = vunpack.c.l.b16 %v472
      %v512 = vunpack.c.l.b16 %v473
      %v513 = vunpack.c.l.b16 %v474
      %v514 = vunpack.c.l.b16 %v475
      %v515 = vunpack.c.l.b16 %v476
      %v516 = vunpack.c.l.b16 %v477
      %v517 = vunpack.c.l.b16 %v478
      %v518 = vunpack.c.l.b16 %v479
      %v519 = vunpack.c.l.b16 %v480
      %v520 = vunpack.c.l.b16 %v481
      %v521 = vunpack.c.l.b16 %v482
      %v522 = vunpack.c.l.b16 %v483
      %v523 = vpack.c.b16 %v508, %v507
      %v524 = vpack.c.b16 %v510, %v509
      %v525 = vpack.c.b16 %v512, %v511
      %v526 = vpack.c.b16 %v514, %v513
      %v527 = vpack.c.b16 %v516, %v515
      %v528 = vpack.c.b16 %v518, %v517
      %v529 = vpack.c.b16 %v520, %v519
      %v530 = vpack.c.b16 %v522, %v521
      %539 = vmatprep.subr.bf16.mxu0 0
      %540 = vmatpush1.bf16.msra.mxu0 %v530
      %541 = vmatprep.subr.bf16.mxu0 0
      %542 = vmatpush1.bf16.msra.mxu0 %v529
      %543 = vmatprep.subr.bf16.mxu0 0
      %544 = vmatpush1.bf16.msra.mxu0 %v528
      %545 = vmatprep.subr.bf16.mxu0 0
      %546 = vmatpush1.bf16.msra.mxu0 %v527
      %547 = vmatprep.subr.bf16.mxu0 0
      %548 = vmatpush1.bf16.msra.mxu0 %v526
      %549 = vmatprep.subr.bf16.mxu0 0
      %550 = vmatpush1.bf16.msra.mxu0 %v525
      %551 = vmatprep.subr.bf16.mxu0 0
      %552 = vmatpush1.bf16.msra.mxu0 %v524
      %553 = vmatprep.subr.bf16.mxu0 0
      %554 = vmatpush1.bf16.msra.mxu0 %v523
      %555 = vmatprep.subr.bf16.mxu0 0
      %556 = vmatpush2.bf16.msra.mxu0 0
      %557 = vmatprep.subr.bf16.mxu0 0
      %558 = vmatpush2.bf16.msra.mxu0 0
      %559 = vmatprep.subr.bf16.mxu0 0
      %560 = vmatpush2.bf16.msra.mxu0 0
      %561 = vmatprep.subr.bf16.mxu0 0
      %562 = vmatpush2.bf16.msra.mxu0 0
      %563 = vmatprep.subr.bf16.mxu0 0
      %564 = vmatpush2.bf16.msra.mxu0 0
      %565 = vmatprep.subr.bf16.mxu0 0
      %566 = vmatpush2.bf16.msra.mxu0 0
      %567 = vmatprep.subr.bf16.mxu0 0
      %568 = vmatpush2.bf16.msra.mxu0 0
      %569 = vmatprep.subr.bf16.mxu0 0
      %570 = vmatpush2.bf16.msra.mxu0 0
      %571 = vmatprep.mubr.bf16.mxu0 0
      %572 = vmatmul.mubr.bf16.gmra.mxu0 %v460
      %v573 = vpop.f32.mrf.mxu0
      %v574 = vadd.f32 %v489, %v573
      %v575 = vpop.f32.mrf.mxu0
      %v576 = vpop.f32.mrf.mxu0
      %v577 = vadd.f32 %v489, %v576
      %v578 = vpop.f32.mrf.mxu0
      %579 = vmatprep.mubr.bf16.mxu0 0
      %580 = vmatmul.mubr.bf16.gmra.mxu0 %v461
      %v581 = vpop.f32.mrf.mxu0
      %v582 = vadd.f32 %v489, %v581
      %v583 = vpop.f32.mrf.mxu0
      %v584 = vpop.f32.mrf.mxu0
      %v585 = vadd.f32 %v489, %v584
      %v586 = vpop.f32.mrf.mxu0
      %587 = vmatprep.mubr.bf16.mxu0 0
      %588 = vmatmul.mubr.bf16.gmra.mxu0 %v462
      %v589 = vpop.f32.mrf.mxu0
      %v590 = vadd.f32 %v489, %v589
      %v591 = vpop.f32.mrf.mxu0
      %v592 = vpop.f32.mrf.mxu0
      %v593 = vadd.f32 %v489, %v592
      %v594 = vpop.f32.mrf.mxu0
      %595 = vmatprep.mubr.bf16.mxu0 0
      %596 = vmatmul.mubr.bf16.gmra.mxu0 %v463
      %v597 = vpop.f32.mrf.mxu0
      %v598 = vadd.f32 %v489, %v597
      %v599 = vpop.f32.mrf.mxu0
      %v600 = vpop.f32.mrf.mxu0
      %v601 = vadd.f32 %v489, %v600
      %v602 = vpop.f32.mrf.mxu0
      %603 = vmatprep.mubr.bf16.mxu0 0
      %604 = vmatmul.mubr.bf16.gmra.mxu0 %v464
      %v605 = vpop.f32.mrf.mxu0
      %v606 = vadd.f32 %v489, %v605
      %v607 = vpop.f32.mrf.mxu0
      %v608 = vpop.f32.mrf.mxu0
      %v609 = vadd.f32 %v489, %v608
      %v610 = vpop.f32.mrf.mxu0
      %611 = vmatprep.mubr.bf16.mxu0 0
      %612 = vmatmul.mubr.bf16.gmra.mxu0 %v465
      %v613 = vpop.f32.mrf.mxu0
      %v614 = vadd.f32 %v489, %v613
      %v615 = vpop.f32.mrf.mxu0
      %v616 = vpop.f32.mrf.mxu0
      %v617 = vadd.f32 %v489, %v616
      %v618 = vpop.f32.mrf.mxu0
      %619 = vmatprep.mubr.bf16.mxu0 0
      %620 = vmatmul.mubr.bf16.gmra.mxu0 %v466
      %v621 = vpop.f32.mrf.mxu0
      %v622 = vadd.f32 %v489, %v621
      %v623 = vpop.f32.mrf.mxu0
      %v624 = vpop.f32.mrf.mxu0
      %v625 = vadd.f32 %v489, %v624
      %v626 = vpop.f32.mrf.mxu0
      %627 = vmatprep.mubr.bf16.mxu0 0
      %628 = vmatmul.mubr.bf16.gmra.mxu0 %v467
      %v629 = vpop.f32.mrf.mxu0
      %v630 = vadd.f32 %v489, %v629
      %v631 = vpop.f32.mrf.mxu0
      %v632 = vpop.f32.mrf.mxu0
      %v633 = vadd.f32 %v489, %v632
      %v634 = vpop.f32.mrf.mxu0
      %635 = vdwg.mxu0
      %v636 = vtanh.pop %v574
      %v637 = vtanh.pop %v577
      %v638 = vtanh.pop %v582
      %v639 = vtanh.pop %v585
      %v640 = vtanh.pop %v590
      %v641 = vtanh.pop %v593
      %v642 = vtanh.pop %v598
      %v643 = vtanh.pop %v601
      %v644 = vtanh.pop %v606
      %v645 = vtanh.pop %v609
      %v646 = vtanh.pop %v614
      %v647 = vtanh.pop %v617
      %v648 = vtanh.pop %v622
      %v649 = vtanh.pop %v625
      %v650 = vtanh.pop %v630
      %v651 = vtanh.pop %v633
      %v652 = vpack.c.bf16 %v637, %v636
      %v653 = vpack.c.bf16 %v639, %v638
      %v654 = vpack.c.bf16 %v641, %v640
      %v655 = vpack.c.bf16 %v643, %v642
      %v656 = vpack.c.bf16 %v645, %v644
      %v657 = vpack.c.bf16 %v647, %v646
      %v658 = vpack.c.bf16 %v649, %v648
      %v659 = vpack.c.bf16 %v651, %v650
      %v660 = vld [vmem:[%s5] sm:$0xf]
      %v661 = vld [vmem:[%s5 + $0x4] sm:$0xf]
      %v662 = vld [vmem:[%s5 + $0x8] sm:$0xf]
      %v663 = vld [vmem:[%s5 + $0xc] sm:$0xf]
      %v664 = vld [vmem:[%s5 + $0x10] sm:$0xf]
      %v665 = vld [vmem:[%s5 + $0x14] sm:$0xf]
      %v666 = vld [vmem:[%s5 + $0x18] sm:$0xf]
      %v667 = vld [vmem:[%s5 + $0x1c] sm:$0xf]
      %v668 = vld [vmem:[%s5 + $0x20] sm:$0xf]
      %v669 = vld [vmem:[%s5 + $0x24] sm:$0xf]
      %v670 = vld [vmem:[%s5 + $0x28] sm:$0xf]
      %v671 = vld [vmem:[%s5 + $0x2c] sm:$0xf]
      %v672 = vld [vmem:[%s5 + $0x30] sm:$0xf]
      %v673 = vld [vmem:[%s5 + $0x34] sm:$0xf]
      %v674 = vld [vmem:[%s5 + $0x38] sm:$0xf]
      %v675 = vld [vmem:[%s5 + $0x3c] sm:$0xf]
      %v676 = vld [vmem:[%s6] sm:$0x1]
      %v678 = vlaneseq
      %v679 = vshrl.u32 %v678, 7
      %v680 = vsub.s32 0, %v679
      %v681 = vrot.slane %v676, %v680
      %v699 = vunpack.c.l.b16 %v660
      %v700 = vunpack.c.l.b16 %v661
      %v701 = vunpack.c.l.b16 %v662
      %v702 = vunpack.c.l.b16 %v663
      %v703 = vunpack.c.l.b16 %v664
      %v704 = vunpack.c.l.b16 %v665
      %v705 = vunpack.c.l.b16 %v666
      %v706 = vunpack.c.l.b16 %v667
      %v707 = vunpack.c.l.b16 %v668
      %v708 = vunpack.c.l.b16 %v669
      %v709 = vunpack.c.l.b16 %v670
      %v710 = vunpack.c.l.b16 %v671
      %v711 = vunpack.c.l.b16 %v672
      %v712 = vunpack.c.l.b16 %v673
      %v713 = vunpack.c.l.b16 %v674
      %v714 = vunpack.c.l.b16 %v675
      %v715 = vpack.c.b16 %v700, %v699
      %v716 = vpack.c.b16 %v702, %v701
      %v717 = vpack.c.b16 %v704, %v703
      %v718 = vpack.c.b16 %v706, %v705
      %v719 = vpack.c.b16 %v708, %v707
      %v720 = vpack.c.b16 %v710, %v709
      %v721 = vpack.c.b16 %v712, %v711
      %v722 = vpack.c.b16 %v714, %v713
      %731 = vmatprep.subr.bf16.mxu0 0
      %732 = vmatpush1.bf16.msra.mxu0 %v722
      %733 = vmatprep.subr.bf16.mxu0 0
      %734 = vmatpush1.bf16.msra.mxu0 %v721
      %735 = vmatprep.subr.bf16.mxu0 0
      %736 = vmatpush1.bf16.msra.mxu0 %v720
      %737 = vmatprep.subr.bf16.mxu0 0
      %738 = vmatpush1.bf16.msra.mxu0 %v719
      %739 = vmatprep.subr.bf16.mxu0 0
      %740 = vmatpush1.bf16.msra.mxu0 %v718
      %741 = vmatprep.subr.bf16.mxu0 0
      %742 = vmatpush1.bf16.msra.mxu0 %v717
      %743 = vmatprep.subr.bf16.mxu0 0
      %744 = vmatpush1.bf16.msra.mxu0 %v716
      %745 = vmatprep.subr.bf16.mxu0 0
      %746 = vmatpush1.bf16.msra.mxu0 %v715
      %747 = vmatprep.subr.bf16.mxu0 0
      %748 = vmatpush2.bf16.msra.mxu0 0
      %749 = vmatprep.subr.bf16.mxu0 0
      %750 = vmatpush2.bf16.msra.mxu0 0
      %751 = vmatprep.subr.bf16.mxu0 0
      %752 = vmatpush2.bf16.msra.mxu0 0
      %753 = vmatprep.subr.bf16.mxu0 0
      %754 = vmatpush2.bf16.msra.mxu0 0
      %755 = vmatprep.subr.bf16.mxu0 0
      %756 = vmatpush2.bf16.msra.mxu0 0
      %757 = vmatprep.subr.bf16.mxu0 0
      %758 = vmatpush2.bf16.msra.mxu0 0
      %759 = vmatprep.subr.bf16.mxu0 0
      %760 = vmatpush2.bf16.msra.mxu0 0
      %761 = vmatprep.subr.bf16.mxu0 0
      %762 = vmatpush2.bf16.msra.mxu0 0
      %763 = vmatprep.mubr.bf16.mxu0 0
      %764 = vmatmul.mubr.bf16.gmra.mxu0 %v652
      %v765 = vpop.f32.mrf.mxu0
      %v766 = vadd.f32 %v681, %v765
      %v767 = vpop.f32.mrf.mxu0
      %v768 = vpop.f32.mrf.mxu0
      %v769 = vadd.f32 %v681, %v768
      %v770 = vpop.f32.mrf.mxu0
      %771 = vmatprep.mubr.bf16.mxu0 0
      %772 = vmatmul.mubr.bf16.gmra.mxu0 %v653
      %v773 = vpop.f32.mrf.mxu0
      %v774 = vadd.f32 %v681, %v773
      %v775 = vpop.f32.mrf.mxu0
      %v776 = vpop.f32.mrf.mxu0
      %v777 = vadd.f32 %v681, %v776
      %v778 = vpop.f32.mrf.mxu0
      %779 = vmatprep.mubr.bf16.mxu0 0
      %780 = vmatmul.mubr.bf16.gmra.mxu0 %v654
      %v781 = vpop.f32.mrf.mxu0
      %v782 = vadd.f32 %v681, %v781
      %v783 = vpop.f32.mrf.mxu0
      %v784 = vpop.f32.mrf.mxu0
      %v785 = vadd.f32 %v681, %v784
      %v786 = vpop.f32.mrf.mxu0
      %787 = vmatprep.mubr.bf16.mxu0 0
      %788 = vmatmul.mubr.bf16.gmra.mxu0 %v655
      %v789 = vpop.f32.mrf.mxu0
      %v790 = vadd.f32 %v681, %v789
      %v791 = vpop.f32.mrf.mxu0
      %v792 = vpop.f32.mrf.mxu0
      %v793 = vadd.f32 %v681, %v792
      %v794 = vpop.f32.mrf.mxu0
      %795 = vmatprep.mubr.bf16.mxu0 0
      %796 = vmatmul.mubr.bf16.gmra.mxu0 %v656
      %v797 = vpop.f32.mrf.mxu0
      %v798 = vadd.f32 %v681, %v797
      %v799 = vpop.f32.mrf.mxu0
      %v800 = vpop.f32.mrf.mxu0
      %v801 = vadd.f32 %v681, %v800
      %v802 = vpop.f32.mrf.mxu0
      %803 = vmatprep.mubr.bf16.mxu0 0
      %804 = vmatmul.mubr.bf16.gmra.mxu0 %v657
      %v805 = vpop.f32.mrf.mxu0
      %v806 = vadd.f32 %v681, %v805
      %v807 = vpop.f32.mrf.mxu0
      %v808 = vpop.f32.mrf.mxu0
      %v809 = vadd.f32 %v681, %v808
      %v810 = vpop.f32.mrf.mxu0
      %811 = vmatprep.mubr.bf16.mxu0 0
      %812 = vmatmul.mubr.bf16.gmra.mxu0 %v658
      %v813 = vpop.f32.mrf.mxu0
      %v814 = vadd.f32 %v681, %v813
      %v815 = vpop.f32.mrf.mxu0
      %v816 = vpop.f32.mrf.mxu0
      %v817 = vadd.f32 %v681, %v816
      %v818 = vpop.f32.mrf.mxu0
      %819 = vmatprep.mubr.bf16.mxu0 0
      %820 = vmatmul.mubr.bf16.gmra.mxu0 %v659
      %v821 = vpop.f32.mrf.mxu0
      %v822 = vadd.f32 %v681, %v821
      %v823 = vpop.f32.mrf.mxu0
      %v824 = vpop.f32.mrf.mxu0
      %v825 = vadd.f32 %v681, %v824
      %v826 = vpop.f32.mrf.mxu0
      %827 = vdwg.mxu0
      %828 = vst [vmem:[%s280] sm:$0xff] %v766
      %829 = vst [vmem:[%s280 + $0x8] sm:$0xff] %v769
      %830 = vst [vmem:[%s280 + $0x10] sm:$0xff] %v774
      %831 = vst [vmem:[%s280 + $0x18] sm:$0xff] %v777
      %832 = vst [vmem:[%s280 + $0x20] sm:$0xff] %v782
      %833 = vst [vmem:[%s280 + $0x28] sm:$0xff] %v785
      %834 = vst [vmem:[%s280 + $0x30] sm:$0xff] %v790
      %835 = vst [vmem:[%s280 + $0x38] sm:$0xff] %v793
      %836 = vst [vmem:[%s280 + $0x40] sm:$0xff] %v798
      %837 = vst [vmem:[%s280 + $0x48] sm:$0xff] %v801
      %838 = vst [vmem:[%s280 + $0x50] sm:$0xff] %v806
      %839 = vst [vmem:[%s280 + $0x58] sm:$0xff] %v809
      %840 = vst [vmem:[%s280 + $0x60] sm:$0xff] %v814
      %841 = vst [vmem:[%s280 + $0x68] sm:$0xff] %v817
      %842 = vst [vmem:[%s280 + $0x70] sm:$0xff] %v822
      %843 = vst [vmem:[%s280 + $0x78] sm:$0xff] %v825
      %s844 = smul.u32 16, %s18
      %p845 = scmp.lt.s32.totalorder %s844, 31
      %s846 = scalar_select %p845, %s844, 31
      %s847 = smul.addr %s846, 8
      %s848 = scalar_lea.vmem %s7, %s847
      // Predicated region
      $region49: #{_mlp_forward_impl.1} parent=47 // pred_check
        %p849 = pneg %p188
      $region50: #{_mlp_forward_impl.1} parent=47 // pred_check_branch
        %851 = sbr.rel (%p849) target = $region52
      $region51: #{_mlp_forward_impl.1} parent=47 // pred_region
        %s852 = smul.u32 16, %s18
      $region52: #{_mlp_forward_impl.1} parent=47 // pred_fallthru
        _
    $region48: #{_mlp_forward_impl.1} parent=5 // pred_fallthru
      _
    %p853 = scmp.le.s32.totalorder 2, %s13
    // Predicated region
    $region53: #{_mlp_forward_impl.1} parent=5 // pred_check
      %p854 = pneg %p853
    $region54: #{_mlp_forward_impl.1} parent=5 // pred_check_branch
      %856 = sbr.rel (%p854) target = $region56
    $region55: #{_mlp_forward_impl.1} parent=5 // pred_region
      %s857 = ssub.s32 %s13, 2
      // Predicated region
      $region57: #{_mlp_forward_impl.1} parent=55 // pred_check
        %p858 = pneg %p194
      $region58: #{_mlp_forward_impl.1} parent=55 // pred_check_branch
        %860 = sbr.rel (%p858) target = $region60
      $region59: #{_mlp_forward_impl.1} parent=55 // pred_region
        %s861 = smul.u32 16, %s19
        %p862 = scmp.lt.s32.totalorder %s861, 31
        %s863 = scalar_select %p862, %s861, 31
        %s864 = smul.addr %s863, 8
        %s865 = scalar_lea.vmem %s7, %s864
      $region60: #{_mlp_forward_impl.1} parent=55 // pred_fallthru
        _
    $region56: #{_mlp_forward_impl.1} parent=5 // pred_fallthru
      _
  $region6: #{_mlp_forward_impl.1} parent=0 // loop_footer
    %s17 = sadd.s32 1, %s13
  $region7: #{_mlp_forward_impl.1} parent=0 // loop_footer_branch
    %12 = sbr.rel target = $region3
  $region8: #{_mlp_forward_impl.1} parent=0 // loop_exit
    _

</llo_original>
